<compile_context>
chip_gen: v7x
topology: tpu7x:2x2x1
jax: 0.10.0
libtpu: 0.0.40
codegen_flags: <defaults>
</compile_context>

<pallas_src>
import math
import functools

import jax
import jax.numpy as jnp
from jax.experimental import pallas as pl
from jax.experimental.pallas import tpu as pltpu


MASK_BIAS = -1e30                    # finite negative bias: NaN-safe
_VMEM_LIMIT = 64 * 1024 * 1024       # raise scoped VMEM (defaults: 16/32 MiB)


def _round_up(n: int, m: int) -> int:
    return ((n + m - 1) // m) * m


def _tile_and_pad(n: int, max_tile: int, align: int):
    """Pick a tile (multiple of `align`, <= ~max_tile) and the padded extent."""
    n_al = _round_up(n, align)
    if n_al <= max_tile:
        return n_al, n_al
    ntiles = -(-n_al // max_tile)                 # ceil
    tile = _round_up(-(-n_al // ntiles), align)
    return tile, tile * ntiles


# ---------------------------------------------------------------------------
# Linear: y = x @ W + b
# Grid (N tiles, M tiles) with M innermost: the weight / bias blocks depend
# only on the N index, so they stay resident across the whole inner M sweep
# (weight streamed once per N tile -> works on v7x's 64 MiB VMEM too).
# ---------------------------------------------------------------------------
def _linear_kernel(x_ref, w_ref, b_ref, o_ref):
    x = x_ref[...].astype(jnp.bfloat16)
    w = w_ref[...].astype(jnp.bfloat16)
    acc = jnp.dot(x, w, preferred_element_type=jnp.float32)
    o_ref[...] = (acc + b_ref[...].astype(jnp.float32)).astype(o_ref.dtype)


def _linear(x2d, w, b, out_dtype, *, row_tile=512, col_tile=1024):
    M, K = x2d.shape
    Kw, N = w.shape
    assert K == Kw
    tm, M_pad = _tile_and_pad(M, row_tile, 8)
    tn, N_pad = _tile_and_pad(N, col_tile, 128)

    if M_pad != M:
        x2d = jnp.pad(x2d, ((0, M_pad - M), (0, 0)))
    if N_pad != N:
        w = jnp.pad(w, ((0, 0), (0, N_pad - N)))
        b = jnp.pad(b, (0, N_pad - N))
    b2 = b.reshape(1, N_pad)

    out = pl.pallas_call(
        _linear_kernel,
        out_shape=jax.ShapeDtypeStruct((M_pad, N_pad), out_dtype),
        grid_spec=pltpu.PrefetchScalarGridSpec(
            num_scalar_prefetch=0,
            grid=(N_pad // tn, M_pad // tm),          # N outer, M inner
            in_specs=[
                pl.BlockSpec((tm, K), lambda j, i: (i, 0)),
                pl.BlockSpec((K, tn), lambda j, i: (0, j)),   # resident per N tile
                pl.BlockSpec((1, tn), lambda j, i: (0, j)),   # resident per N tile
            ],
            out_specs=pl.BlockSpec((tm, tn), lambda j, i: (i, j)),
        ),
        compiler_params=pltpu.CompilerParams(
            dimension_semantics=("parallel", "parallel"),
            vmem_limit_bytes=_VMEM_LIMIT),
    )(x2d, w, b2)

    if M_pad != M or N_pad != N:
        out = out[:M, :N]
    return out


# ---------------------------------------------------------------------------
# Flash attention: grid (B, n_head, q_tiles, kv_tiles), online softmax.
# ---------------------------------------------------------------------------
def _flash_kernel(q_ref, k_ref, v_ref, o_ref, m_sc, l_sc, acc_sc, qs_sc,
                  *, scale, tq, tk):
    qi = pl.program_id(2)
    ki = pl.program_id(3)
    nk = pl.num_programs(3)

    @pl.when(ki == 0)
    def _init():
        m_sc[...] = jnp.full(m_sc.shape, -jnp.inf, m_sc.dtype)
        l_sc[...] = jnp.zeros(l_sc.shape, l_sc.dtype)
        acc_sc[...] = jnp.zeros(acc_sc.shape, acc_sc.dtype)
        # fold 1/sqrt(hd) into q once per q tile (hoisted out of the kv loop)
        qs_sc[...] = (q_ref[...].astype(jnp.float32) * scale).astype(jnp.bfloat16)

    # Tile classification (tile sizes static, tile indices traced scalars).
    visible = ki * tk < (qi + 1) * tq            # some key column is visible
    full = (ki + 1) * tk <= qi * tq + 1          # every key column visible -> no mask

    def _scores():
        return jax.lax.dot_general(
            qs_sc[...], k_ref[...], (((1,), (1,)), ((), ())),
            preferred_element_type=jnp.float32)               # (tq, tk) f32

    def _update(att):
        m_prev = m_sc[...]
        m_new = jnp.maximum(m_prev, att.max(axis=-1, keepdims=True))
        alpha = jnp.exp(m_prev - m_new)
        p = jnp.exp(att - m_new)
        l_sc[...] = alpha * l_sc[...] + p.sum(axis=-1, keepdims=True)
        acc_sc[...] = alpha * acc_sc[...] + jnp.dot(
            p.astype(jnp.bfloat16), v_ref[...], preferred_element_type=jnp.float32)
        m_sc[...] = m_new

    @pl.when(full)
    def _below_diag():                    # fully visible tile: no mask built
        _update(_scores())

    @pl.when(jnp.logical_and(visible, jnp.logical_not(full)))
    def _diag_crossing():                 # diagonal tile: additive causal bias
        att = _scores()
        row = qi * tq + jax.lax.broadcasted_iota(jnp.int32, (tq, tk), 0)
        col = ki * tk + jax.lax.broadcasted_iota(jnp.int32, (tq, tk), 1)
        _update(att + jnp.where(col > row, MASK_BIAS, 0.0))

    @pl.when(ki == nk - 1)
    def _finalize():
        inv_l = pl.reciprocal(l_sc[...], approx=True)
        o_ref[...] = (acc_sc[...] * inv_l).astype(o_ref.dtype)


def _flash_attention(q, k, v, *, q_tile=512, kv_tile=512):
    B, H, T, D = q.shape
    tile, T_pad = _tile_and_pad(T, min(q_tile, kv_tile), 8)
    tq = tk = tile                          # equal tiles (kv clamp relies on it)
    if T_pad != T:
        pad = ((0, 0), (0, 0), (0, T_pad - T), (0, 0))
        # zero-padded keys sit at positions >= T, so the causal mask hides them
        # from every real query row; padded query rows are sliced off below.
        q, k, v = jnp.pad(q, pad), jnp.pad(k, pad), jnp.pad(v, pad)

    def q_map(b, h, qi, ki):
        return (b, h, qi, 0)

    def kv_map(b, h, qi, ki):
        # Fully-masked (above-diagonal) kv tiles repeat the previous block
        # index, so Pallas elides their HBM fetch; compute is skipped by pl.when.
        return (b, h, jnp.minimum(ki, qi), 0)

    kernel = functools.partial(_flash_kernel, scale=1.0 / math.sqrt(D), tq=tq, tk=tk)
    out = pl.pallas_call(
        kernel,
        out_shape=jax.ShapeDtypeStruct((B, H, T_pad, D), jnp.bfloat16),
        grid_spec=pltpu.PrefetchScalarGridSpec(
            num_scalar_prefetch=0,
            grid=(B, H, T_pad // tq, T_pad // tk),
            in_specs=[
                pl.BlockSpec((pl.Squeezed(), pl.Squeezed(), tq, D), q_map),
                pl.BlockSpec((pl.Squeezed(), pl.Squeezed(), tk, D), kv_map),
                pl.BlockSpec((pl.Squeezed(), pl.Squeezed(), tk, D), kv_map),
            ],
            out_specs=pl.BlockSpec((pl.Squeezed(), pl.Squeezed(), tq, D), q_map),
            scratch_shapes=[
                pltpu.VMEM((tq, 1), jnp.float32),   # running max m
                pltpu.VMEM((tq, 1), jnp.float32),   # running denom l
                pltpu.VMEM((tq, D), jnp.float32),   # output accumulator
                pltpu.VMEM((tq, D), jnp.bfloat16),  # pre-scaled q tile
            ],
        ),
        compiler_params=pltpu.CompilerParams(
            dimension_semantics=("parallel", "parallel", "parallel", "arbitrary"),
            vmem_limit_bytes=_VMEM_LIMIT),
    )(q, k, v)

    if T_pad != T:
        out = out[:, :, :T, :]
    return out


# ---------------------------------------------------------------------------
# Full forward (eval-mode): qkv projection -> flash attention -> output proj
# ---------------------------------------------------------------------------
def causal_self_attention(x, w_attn, b_attn, w_proj, b_proj, *, n_head,
                          q_tile=512, kv_tile=512, row_tile=512, col_tile=1024):
    """x: (B, T, C); w_attn: (C, 3C); b_attn: (3C,); w_proj: (C, C); b_proj: (C,)."""
    B, T, C = x.shape
    assert C % n_head == 0
    hd = C // n_head

    # bf16 weights: halve weight DMA; accumulation stays f32 in the kernels.
    w_attn_bf = w_attn.astype(jnp.bfloat16)
    w_proj_bf = w_proj.astype(jnp.bfloat16)

    # 1) QKV projection (bf16 activations -> halves downstream HBM traffic)
    qkv = _linear(x.reshape(B * T, C), w_attn_bf, b_attn, jnp.bfloat16,
                  row_tile=row_tile, col_tile=col_tile)          # (B*T, 3C)

    # 2) split q/k/v, heads to a leading axis: (B, n_head, T, hd)
    qkv = qkv.reshape(B, T, 3, n_head, hd)
    q = qkv[:, :, 0].transpose(0, 2, 1, 3)
    k = qkv[:, :, 1].transpose(0, 2, 1, 3)
    v = qkv[:, :, 2].transpose(0, 2, 1, 3)

    # 3) causal flash attention with online softmax
    y = _flash_attention(q, k, v, q_tile=q_tile, kv_tile=kv_tile)  # (B, nh, T, hd)

    # 4) back to (B, T, C) and output projection (f32 out, matches module dtype)
    y = y.transpose(0, 2, 1, 3).reshape(B * T, C)
    out = _linear(y, w_proj_bf, b_proj, jnp.float32,
                  row_tile=row_tile, col_tile=col_tile)
    return out.reshape(B, T, C)


def _reference(x, w_attn, b_attn, w_proj, b_proj, n_head):
    """Plain-JAX f32 reference mirroring the PyTorch forward (eval mode)."""
    B, T, C = x.shape
    hd = C // n_head
    qkv = x @ w_attn + b_attn
    q, k, v = jnp.split(qkv, 3, axis=-1)

    def heads(t):
        return t.reshape(B, T, n_head, hd).transpose(0, 2, 1, 3)

    q, k, v = heads(q), heads(k), heads(v)
    att = (q @ k.transpose(0, 1, 3, 2)) * (1.0 / math.sqrt(hd))
    mask = jnp.tril(jnp.ones((T, T), bool))
    att = jnp.where(mask[None, None], att, -jnp.inf)
    att = jax.nn.softmax(att, axis=-1)
    y = att @ v
    y = y.transpose(0, 2, 1, 3).reshape(B, T, C)
    return y @ w_proj + b_proj


if __name__ == "__main__":
    # config: n_embd=32, n_head=4, batch B=2
    B, C, N_HEAD = 2, 32, 4

    key = jax.random.PRNGKey(0)
    kx, kwa, kba, kwp, kbp = jax.random.split(key, 5)

    w_attn = jax.random.normal(kwa, (C, 3 * C), dtype=jnp.float32) * 0.02
    b_attn = jax.random.normal(kba, (3 * C,), dtype=jnp.float32) * 0.02
    w_proj = jax.random.normal(kwp, (C, C), dtype=jnp.float32) * 0.02
    b_proj = jax.random.normal(kbp, (C,), dtype=jnp.float32) * 0.02

    # Case 1: T=16 with tiny tiles -> exercises multi-(q,kv)-tile online softmax,
    # the clamped (DMA-elided) above-diagonal tiles, the mask-free below-diagonal
    # branch, and the diagonal-crossing masked branch, plus M-tiling in _linear.
    T1 = 16
    x1 = jax.random.normal(kx, (B, T1, C), dtype=jnp.float32)
    out1 = causal_self_attention(x1, w_attn, b_attn, w_proj, b_proj,
                                 n_head=N_HEAD, q_tile=8, kv_tile=8, row_tile=16)
    out1 = jax.block_until_ready(out1)
    ref1 = _reference(x1, w_attn, b_attn, w_proj, b_proj, N_HEAD)
    assert out1.shape == (B, T1, C)
    err1 = float(jnp.max(jnp.abs(out1 - ref1)))
    assert jnp.allclose(out1, ref1, atol=1e-2, rtol=1e-2), f"case1 max_abs_err={err1}"

    # Case 2: T=12 (not tile aligned) -> exercises pad-to-tile on both the
    # sequence axis (flash) and the row axis (linear), with default flash tiles.
    T2 = 12
    x2 = jax.random.normal(jax.random.PRNGKey(1), (B, T2, C), dtype=jnp.float32)
    out2 = causal_self_attention(x2, w_attn, b_attn, w_proj, b_proj,
                                 n_head=N_HEAD, row_tile=16)
    out2 = jax.block_until_ready(out2)
    ref2 = _reference(x2, w_attn, b_attn, w_proj, b_proj, N_HEAD)
    assert out2.shape == (B, T2, C)
    err2 = float(jnp.max(jnp.abs(out2 - ref2)))
    assert jnp.allclose(out2, ref2, atol=1e-2, rtol=1e-2), f"case2 max_abs_err={err2}"

    print("KERNEL_OK")
</pallas_src>

<mosaic_0001>
module attributes {stable_mosaic.version = 11 : i64} {
  func.func @_linear_kernel(%arg0: i32, %arg1: i32, %arg2: memref<16x32xf32, #tpu.memory_space<vmem>>, %arg3: memref<32x128xbf16, #tpu.memory_space<vmem>>, %arg4: memref<1x128xf32, #tpu.memory_space<vmem>>, %arg5: memref<16x128xbf16, #tpu.memory_space<vmem>>) attributes {dimension_semantics = [#tpu.dimension_semantics<parallel>, #tpu.dimension_semantics<parallel>], iteration_bounds = array<i64: 1, 2>, scalar_prefetch = 0 : i64, scratch_operands = 0 : i64, tpu.core_type = #tpu.core_type<tc>, window_params = [{transform_indices = @transform_0, window_bounds = array<i64: 16, 32>}, {transform_indices = @transform_1, window_bounds = array<i64: 32, 128>}, {transform_indices = @transform_2, window_bounds = array<i64: 1, 128>}, {transform_indices = @transform_3, window_bounds = array<i64: 16, 128>}]} {
    %c0 = arith.constant 0 : index
    %c0_0 = arith.constant 0 : index
    %0 = vector.load %arg2[%c0, %c0_0] : memref<16x32xf32, #tpu.memory_space<vmem>>, vector<16x32xf32>
    %1 = arith.truncf %0 : vector<16x32xf32> to vector<16x32xbf16>
    %c0_1 = arith.constant 0 : index
    %c0_2 = arith.constant 0 : index
    %2 = vector.load %arg3[%c0_1, %c0_2] : memref<32x128xbf16, #tpu.memory_space<vmem>>, vector<32x128xbf16>
    %cst = arith.constant dense<0.000000e+00> : vector<16x128xf32>
    %3 = tpu.matmul %1, %2, %cst {dimension_numbers = #tpu.dot_dimension_numbers<[1], [0], [0], [1], [0, 0, 1, 1], [], []>} : vector<16x32xbf16>, vector<32x128xbf16>, vector<16x128xf32> -> vector<16x128xf32>
    %c0_3 = arith.constant 0 : index
    %c0_4 = arith.constant 0 : index
    %4 = vector.load %arg4[%c0_3, %c0_4] : memref<1x128xf32, #tpu.memory_space<vmem>>, vector<1x128xf32>
    %5 = vector.broadcast %4 : vector<1x128xf32> to vector<16x128xf32>
    %6 = arith.addf %3, %5 : vector<16x128xf32>
    %7 = arith.truncf %6 : vector<16x128xf32> to vector<16x128xbf16>
    %c0_5 = arith.constant 0 : index
    %c0_6 = arith.constant 0 : index
    %8 = vector.load %arg5[%c0_5, %c0_6] : memref<16x128xbf16, #tpu.memory_space<vmem>>, vector<16x128xbf16>
    tpu.vector_store %arg5[%c0_5, %c0_6], %7 {strides = array<i32>} : memref<16x128xbf16, #tpu.memory_space<vmem>>, vector<16x128xbf16>,
    return
  }
  func.func @transform_0(%arg0: i32, %arg1: i32) -> (i32, i32) {
    %c0_i32 = arith.constant 0 : i32
    %c0_i32_0 = arith.constant 0 : i32
    return %arg1, %c0_i32 : i32, i32
  }
  func.func @transform_1(%arg0: i32, %arg1: i32) -> (i32, i32) {
    %c0_i32 = arith.constant 0 : i32
    %c0_i32_0 = arith.constant 0 : i32
    return %c0_i32, %arg0 : i32, i32
  }
  func.func @transform_2(%arg0: i32, %arg1: i32) -> (i32, i32) {
    %c0_i32 = arith.constant 0 : i32
    %c0_i32_0 = arith.constant 0 : i32
    return %c0_i32, %arg0 : i32, i32
  }
  func.func @transform_3(%arg0: i32, %arg1: i32) -> (i32, i32) {
    %c0_i32 = arith.constant 0 : i32
    return %arg1, %arg0 : i32, i32
  }
}

</mosaic_0001>

<llo_original>
// kernel: tpu_custom_call.1
$region0: #{tpu_custom_call.1}
  #allocation0 [shape = 'u32[]', space=smem, size = 0x4, offset = 0x4, fixed_abs, tag = 'smem constant byte address 0x4 - core index']
  #allocation1 [shape = 'u32[144,128]{1,0:T(1,128)}', space=vmem, size = 0x12000, scoped, tag = 'internal scratch']
  %s0 = inlined_call_operand.hbm [shape: f32[32,32], index: 0, kind: input, shape index: {}]
  %s1 = inlined_call_operand.hbm [shape: bf16[32,128], index: 1, kind: input, shape index: {}]
  %s2 = inlined_call_operand.hbm [shape: f32[1,128], index: 2, kind: input, shape index: {}]
  %s3 = inlined_call_operand.hbm [shape: bf16[32,128], index: 3, kind: output, shape index: {}]
  %s4 = sld [smem:[#allocation0]]
  $region57: #{tpu_custom_call.1} parent=0
    _
  %s6 = ssub.s32 1, %s4
  %s7 = scalar_select 0, %s6, %s4
  $region1: #{tpu_custom_call.1} parent=0
    #allocation2 [shape = 'u8[16384]{0}', space=vmem, size = 0x4000, scoped, tag = 'input window, operand 0']
    #allocation3 [shape = 's32[2]{0}', space=sflag, size = 0x8, scoped, tag = 'scoped memory for tpu_custom_call.1']
    #allocation4 [shape = 's32[2]{0}', space=sflag, size = 0x8, scoped, tag = 'scoped memory for tpu_custom_call.1']
    #allocation5 [shape = 'u8[8192]{0}', space=vmem, size = 0x2000, scoped, tag = 'input window, operand 1, single buffered']
    #allocation6 [shape = 's32[1]{0}', space=sflag, size = 0x4, scoped, tag = 'scoped memory for tpu_custom_call.1']
    #allocation7 [shape = 'u8[512]{0}', space=vmem, size = 0x400, scoped, tag = 'input window, operand 2, single buffered']
    #allocation8 [shape = 'u8[8192]{0}', space=vmem, size = 0x2000, scoped, tag = 'output window, operand 0']
    %8 = vsyncpa [#allocation3], 0
    %s9 = scalar_lea.sflag [#allocation3], 1
    %10 = vsyncpa %s9, 0
    %11 = vsyncpa [#allocation6], 0
    %12 = vsyncpa [#allocation4], 0
    %s13 = scalar_lea.sflag [#allocation4], 1
    %14 = vsyncpa %s13, 0
    loop: start=0, step=1, limit=4
    $region2: #{tpu_custom_call.1} parent=1 // loop_pre_header
      _
    $region3: #{tpu_custom_call.1} parent=1 // loop_header
      %s16 = sphi 0, %s20
      %p17 = scmp.ge.s32.totalorder %s16, 4
      %s23 = sphi 0, %s35
      %s24 = sphi 0, %s31
      %s25 = sphi 0, %s23
      %s26 = sphi 0, %s24
      %s27 = sphi 0, %s25
      %s28 = sphi 0, %s26
      %s38 = sphi 0, %s40
      %s41 = sphi 0, %s38
      %s42 = sphi 0, %s41
      %s58 = sphi 0, %s42
      %s64 = sphi 0, %s66
      %s67 = sphi 0, %s64
      %s68 = sphi 0, %s67
      %s84 = sphi 0, %s68
      %s90 = sphi 0, %s92
      %s93 = sphi 0, %s90
      %s94 = sphi 0, %s93
      %s110 = sphi 0, %s94
      %s118 = sphi 0, %s120
      %s121 = sphi 0, %s118
      %s122 = sphi 0, %s121
      %s138 = sphi 0, %s122
    $region4: #{tpu_custom_call.1} parent=1 // loop_header_branch
      %19 = sbr.rel (%p17) target = $region8
    $region5: #{tpu_custom_call.1} parent=1 // loop_body
      %s21 = ssub.s32 %s16, 1
      %s22 = ssub.s32 %s16, 2
      %s29 = sadd.s32 1, %s24
      %p30 = scmp.ge.s32.totalorder %s29, 2
      %s31 = scalar_select %p30, 0, %s29
      %s32 = sadd.s32 1, %s23
      %s33 = scalar_select %p30, %s32, %s23
      %p34 = scmp.ge.s32.totalorder %s33, 1
      %s35 = scalar_select %p34, 0, %s33
      %s36 = ssub.s32 %s24, %s31
      %p37 = scmp.eq.s32.totalorder %s36, 0
      %s39 = sadd.s32 %s38, 1
      %s40 = scalar_select %p37, %s38, %s39
      %p43 = pneg %p37
      %p44 = scmp.eq.s32.totalorder %s16, 1
      %p45 = por %p43, %p44
      %p46 = scmp.ne.s32.totalorder %s38, %s41
      %p47 = scmp.eq.s32.totalorder %s16, 0
      %p48 = por %p46, %p47
      %p49 = scmp.ne.s32.totalorder %s38, %s41
      %p50 = scmp.eq.s32.totalorder %s21, 1
      %p51 = por %p49, %p50
      %p52 = scmp.ne.s32.totalorder %s41, %s42
      %p53 = scmp.eq.s32.totalorder %s21, 0
      %p54 = por %p52, %p53
      %p55 = scmp.ne.s32.totalorder %s41, %s42
      %p56 = scmp.eq.s32.totalorder %s22, 1
      %p57 = por %p55, %p56
      %p59 = scmp.ne.s32.totalorder %s42, %s58
      %p60 = scmp.eq.s32.totalorder %s22, 0
      %p61 = por %p59, %p60
      %s62 = ssub.s32 %s23, %s35
      %p63 = scmp.eq.s32.totalorder %s62, 0
      %s65 = sadd.s32 %s64, 1
      %s66 = scalar_select %p63, %s64, %s65
      %p69 = pneg %p63
      %p70 = scmp.eq.s32.totalorder %s16, 1
      %p71 = por %p69, %p70
      %p72 = scmp.ne.s32.totalorder %s64, %s67
      %p73 = scmp.eq.s32.totalorder %s16, 0
      %p74 = por %p72, %p73
      %p75 = scmp.ne.s32.totalorder %s64, %s67
      %p76 = scmp.eq.s32.totalorder %s21, 1
      %p77 = por %p75, %p76
      %p78 = scmp.ne.s32.totalorder %s67, %s68
      %p79 = scmp.eq.s32.totalorder %s21, 0
      %p80 = por %p78, %p79
      %p81 = scmp.ne.s32.totalorder %s67, %s68
      %p82 = scmp.eq.s32.totalorder %s22, 1
      %p83 = por %p81, %p82
      %p85 = scmp.ne.s32.totalorder %s68, %s84
      %p86 = scmp.eq.s32.totalorder %s22, 0
      %p87 = por %p85, %p86
      %s88 = ssub.s32 %s23, %s35
      %p89 = scmp.eq.s32.totalorder %s88, 0
      %s91 = sadd.s32 %s90, 1
      %s92 = scalar_select %p89, %s90, %s91
      %p95 = pneg %p89
      %p96 = scmp.eq.s32.totalorder %s16, 1
      %p97 = por %p95, %p96
      %p98 = scmp.ne.s32.totalorder %s90, %s93
      %p99 = scmp.eq.s32.totalorder %s16, 0
      %p100 = por %p98, %p99
      %p101 = scmp.ne.s32.totalorder %s90, %s93
      %p102 = scmp.eq.s32.totalorder %s21, 1
      %p103 = por %p101, %p102
      %p104 = scmp.ne.s32.totalorder %s93, %s94
      %p105 = scmp.eq.s32.totalorder %s21, 0
      %p106 = por %p104, %p105
      %p107 = scmp.ne.s32.totalorder %s93, %s94
      %p108 = scmp.eq.s32.totalorder %s22, 1
      %p109 = por %p107, %p108
      %p111 = scmp.ne.s32.totalorder %s94, %s110
      %p112 = scmp.eq.s32.totalorder %s22, 0
      %p113 = por %p111, %p112
      %s114 = ssub.s32 %s24, %s31
      %s115 = ssub.s32 %s23, %s35
      %s116 = sor.u32 %s114, %s115
      %p117 = scmp.eq.s32.totalorder %s116, 0
      %s119 = sadd.s32 %s118, 1
      %s120 = scalar_select %p117, %s118, %s119
      %p123 = pneg %p117
      %p124 = scmp.eq.s32.totalorder %s16, 1
      %p125 = por %p123, %p124
      %p126 = scmp.ne.s32.totalorder %s118, %s121
      %p127 = scmp.eq.s32.totalorder %s16, 0
      %p128 = por %p126, %p127
      %p129 = scmp.ne.s32.totalorder %s118, %s121
      %p130 = scmp.eq.s32.totalorder %s21, 1
      %p131 = por %p129, %p130
      %p132 = scmp.ne.s32.totalorder %s121, %s122
      %p133 = scmp.eq.s32.totalorder %s21, 0
      %p134 = por %p132, %p133
      %p135 = scmp.ne.s32.totalorder %s121, %s122
      %p136 = scmp.eq.s32.totalorder %s22, 1
      %p137 = por %p135, %p136
      %p139 = scmp.ne.s32.totalorder %s122, %s138
      %p140 = scmp.eq.s32.totalorder %s22, 0
      %p141 = por %p139, %p140
      %p142 = scmp.le.s32.totalorder 1, %s16
      %p143 = scmp.lt.s32.totalorder %s16, 3
      %p144 = pnand %p142, %p143
      %p145 = pneg %p144
      // Predicated region
      $region9: #{tpu_custom_call.1} parent=5 // pred_check
        _
      $region10: #{tpu_custom_call.1} parent=5 // pred_check_branch
        %147 = sbr.rel (%p144) target = $region12
      $region11: #{tpu_custom_call.1} parent=5 // pred_region
        %s148 = ssub.s32 %s16, 1
        // Predicated region
        $region13: #{tpu_custom_call.1} parent=11 // pred_check
          %p149 = pneg %p80
        $region14: #{tpu_custom_call.1} parent=11 // pred_check_branch
          %151 = sbr.rel (%p149) target = $region16
        $region15: #{tpu_custom_call.1} parent=11 // pred_region
          %s153 = ssub.s32 256, 256
          %154 = vsyncadd [#allocation6], %s153
          %s155 = smul.addr %s25, 64
          %s156 = scalar_lea.hbm %s1, %s155
          %s157 = sshll.u32 [#allocation5], 4
          %s158 = int_to_ptr.vmem [resolvable:$true] %s157
          %163 = dma.hbm_to_vmem [thread:$0]  %s156, 256, %s158, [#allocation6], 64, 64, 4
        $region16: #{tpu_custom_call.1} parent=11 // pred_fallthru
          _
        // Predicated region
        $region17: #{tpu_custom_call.1} parent=11 // pred_check
          %p164 = pneg %p106
        $region18: #{tpu_custom_call.1} parent=11 // pred_check_branch
          %166 = sbr.rel (%p164) target = $region20
        $region19: #{tpu_custom_call.1} parent=11 // pred_region
          %s168 = ssub.s32 16, 16
          %169 = vsyncadd [#allocation6], %s168
          %s170 = smul.addr %s25, 16
          %s171 = scalar_lea.hbm %s2, %s170
          %s173 = sshll.u32 [#allocation7], 4
          %s174 = int_to_ptr.vmem [resolvable:$true] %s173
          %176 = dma.hbm_to_vmem [thread:$0]  %s171, 16, %s174, [#allocation6]
        $region20: #{tpu_custom_call.1} parent=11 // pred_fallthru
          _
      $region12: #{tpu_custom_call.1} parent=5 // pred_fallthru
        _
      %p177 = scmp.lt.s32.totalorder %s16, 2
      // Predicated region
      $region21: #{tpu_custom_call.1} parent=5 // pred_check
        %p178 = pneg %p177
      $region22: #{tpu_custom_call.1} parent=5 // pred_check_branch
        %180 = sbr.rel (%p178) target = $region24
      $region23: #{tpu_custom_call.1} parent=5 // pred_region
        // Predicated region
        $region25: #{tpu_custom_call.1} parent=23 // pred_check
          %p181 = pneg %p48
        $region26: #{tpu_custom_call.1} parent=23 // pred_check_branch
          %183 = sbr.rel (%p181) target = $region28
        $region27: #{tpu_custom_call.1} parent=23 // pred_region
          %s184 = sand.u32 %s38, 1
          %s185 = scalar_lea.sflag [#allocation3], %s184
          %s186 = sand.u32 %s38, 1
          %s187 = smul.addr %s186, 16
          %s188 = scalar_lea.vmem [#allocation2], %s187
          %s189 = smul.u32 2, %s24
          %s191 = ssub.s32 256, 256
          %192 = vsyncadd %s185, %s191
          %s193 = smul.addr %s189, 128
          %s194 = scalar_lea.hbm %s0, %s193
          %s195 = sshll.u32 %s188, 4
          %s196 = int_to_ptr.vmem [resolvable:$true] %s195
          %201 = dma.hbm_to_vmem [thread:$0]  %s194, 256, %s196, %s185, 128, 128, 8
        $region28: #{tpu_custom_call.1} parent=23 // pred_fallthru
          _
      $region24: #{tpu_custom_call.1} parent=5 // pred_fallthru
        _
      %p202 = scmp.le.s32.totalorder 1, %s16
      %p203 = scmp.lt.s32.totalorder %s16, 3
      %p204 = pnand %p202, %p203
      %p205 = pneg %p204
      // Predicated region
      $region29: #{tpu_custom_call.1} parent=5 // pred_check
        _
      $region30: #{tpu_custom_call.1} parent=5 // pred_check_branch
        %207 = sbr.rel (%p204) target = $region32
      $region31: #{tpu_custom_call.1} parent=5 // pred_region
        %s208 = ssub.s32 %s16, 1
        %s209 = sand.u32 %s41, 1
        %s210 = scalar_lea.sflag [#allocation3], %s209
        %s211 = sand.u32 %s41, 1
        %s212 = smul.addr %s211, 16
        %s213 = scalar_lea.vmem [#allocation2], %s212
        // Predicated region
        $region33: #{tpu_custom_call.1} parent=31 // pred_check
          %p214 = pneg %p54
        $region34: #{tpu_custom_call.1} parent=31 // pred_check_branch
          %216 = sbr.rel (%p214) target = $region36
        $region35: #{tpu_custom_call.1} parent=31 // pred_region
          %217 = dma.done %s210, 256
        $region36: #{tpu_custom_call.1} parent=31 // pred_fallthru
          _
        // Predicated region
        $region37: #{tpu_custom_call.1} parent=31 // pred_check
          %p218 = pneg %p80
        $region38: #{tpu_custom_call.1} parent=31 // pred_check_branch
          %220 = sbr.rel (%p218) target = $region40
        $region39: #{tpu_custom_call.1} parent=31 // pred_region
          %221 = dma.done [#allocation6], 256
        $region40: #{tpu_custom_call.1} parent=31 // pred_fallthru
          _
        // Predicated region
        $region41: #{tpu_custom_call.1} parent=31 // pred_check
          %p222 = pneg %p106
        $region42: #{tpu_custom_call.1} parent=31 // pred_check_branch
          %224 = sbr.rel (%p222) target = $region44
        $region43: #{tpu_custom_call.1} parent=31 // pred_region
          %225 = dma.done [#allocation6], 16
        $region44: #{tpu_custom_call.1} parent=31 // pred_fallthru
          _
        %s226 = sand.u32 %s41, 1
        %s227 = scalar_lea.sflag [#allocation3], %s226
        %s228 = sand.u32 %s41, 1
        %s229 = smul.addr %s228, 16
        %s230 = scalar_lea.vmem [#allocation2], %s229
        %p231 = pneg %p54
        %p232 = pneg %p51
        %p233 = pneg %p80
        %p234 = pneg %p77
        %p235 = pneg %p106
        %p236 = pneg %p103
        %p237 = pneg %p134
        %p238 = pneg %p131
        %s239 = sand.u32 %s121, 1
        %s240 = scalar_lea.sflag [#allocation4], %s239
        %s241 = sand.u32 %s121, 1
        %s242 = smul.addr %s241, 8
        %s243 = scalar_lea.vmem [#allocation8], %s242
        %s244 = smul.u32 2, %s26
        %s245 = smul.u32 2, %s26
        %v247 = vld [vmem:[%s213] sm:$0xff]
        %v248 = vld [vmem:[%s213 + $0x8] sm:$0xff]
        %v249 = vpack.c.bf16 %v248, %v247
        %v250 = vld [vmem:[#allocation5] sm:$0xf]
        %v251 = vld [vmem:[#allocation5 + $0x4] sm:$0xf]
        %v252 = vld [vmem:[#allocation5 + $0x8] sm:$0xf]
        %v253 = vld [vmem:[#allocation5 + $0xc] sm:$0xf]
        %v254 = vld [vmem:[#allocation7] sm:$0x1]
        %v256 = vlaneseq
        %v257 = vshrl.u32 %v256, 7
        %v258 = vsub.s32 0, %v257
        %v259 = vrot.slane %v254, %v258
        %v265 = vunpack.c.l.b16 %v250
        %v266 = vunpack.c.l.b16 %v251
        %v267 = vunpack.c.l.b16 %v252
        %v268 = vunpack.c.l.b16 %v253
        %v269 = vpack.c.b16 %v266, %v265
        %v270 = vpack.c.b16 %v268, %v267
        %vm273 = vcmask 261120
        %v275 = vsel %vm273, %v249, 0
        %277 = vmatprep.subr.bf16.mxu0 0
        %278 = vmatpush1.bf16.msra.mxu0 %v269
        %279 = vmatprep.subr.bf16.mxu0 0
        %280 = vmatpush1.bf16.msra.mxu0 %v270
        %281 = vmatprep.subr.bf16.mxu0 0
        %282 = vmatpush1.bf16.msra.mxu0 0
        %283 = vmatprep.subr.bf16.mxu0 0
        %284 = vmatpush1.bf16.msra.mxu0 0
        %285 = vmatprep.subr.bf16.mxu0 0
        %286 = vmatpush1.bf16.msra.mxu0 0
        %287 = vmatprep.subr.bf16.mxu0 0
        %288 = vmatpush1.bf16.msra.mxu0 0
        %289 = vmatprep.subr.bf16.mxu0 0
        %290 = vmatpush1.bf16.msra.mxu0 0
        %291 = vmatprep.subr.bf16.mxu0 0
        %292 = vmatpush1.bf16.msra.mxu0 0
        %293 = vmatprep.subr.bf16.mxu0 0
        %294 = vmatpush1.bf16.msra.mxu0 0
        %295 = vmatprep.subr.bf16.mxu0 0
        %296 = vmatpush1.bf16.msra.mxu0 0
        %297 = vmatprep.subr.bf16.mxu0 0
        %298 = vmatpush1.bf16.msra.mxu0 0
        %299 = vmatprep.subr.bf16.mxu0 0
        %300 = vmatpush1.bf16.msra.mxu0 0
        %301 = vmatprep.subr.bf16.mxu0 0
        %302 = vmatpush1.bf16.msra.mxu0 0
        %303 = vmatprep.subr.bf16.mxu0 0
        %304 = vmatpush1.bf16.msra.mxu0 0
        %305 = vmatprep.subr.bf16.mxu0 0
        %306 = vmatpush1.bf16.msra.mxu0 0
        %307 = vmatprep.subr.bf16.mxu0 0
        %308 = vmatpush1.bf16.msra.mxu0 0
        %309 = vmatprep.mubr.bf16.mxu0 0
        %310 = vmatmul.mubr.bf16.gmra.mrb[0].mxu0 %v275
        %v311 = vpop.f32.mrb[0].mxu0
        %v312 = vadd.f32 %v259, %v311
        %v313 = vpop.f32.mrb[0].mxu0
        %v314 = vpop.f32.mrb[0].mxu0
        %v315 = vadd.f32 %v259, %v314
        %v316 = vpop.f32.mrb[0].mxu0
        %317 = vdwg.mxu0
        %v318 = vpack.c.bf16 %v315, %v312
        %v320 = vunpack.c.l.b16 %v318
        %v321 = vunpack.c.h.b16 %v318
        %v322 = vpack.c.b16 %v320, %v320
        %v323 = vpack.c.b16 %v321, %v321
        %326 = vst [vmem:[%s243] sm:$0xf] %v322
        %327 = vst [vmem:[%s243 + $0x4] sm:$0xf] %v323
        %s328 = sand.u32 %s121, 1
        %s329 = scalar_lea.sflag [#allocation4], %s328
        %s330 = sand.u32 %s121, 1
        %s331 = smul.addr %s330, 8
        %s332 = scalar_lea.vmem [#allocation8], %s331
        // Predicated region
        $region45: #{tpu_custom_call.1} parent=31 // pred_check
          %p333 = pneg %p131
        $region46: #{tpu_custom_call.1} parent=31 // pred_check_branch
          %335 = sbr.rel (%p333) target = $region48
        $region47: #{tpu_custom_call.1} parent=31 // pred_region
          %s336 = smul.u32 2, %s26
          %s338 = ssub.s32 128, 128
          %339 = vsyncadd %s329, %s338
          %s340 = sadd.s32 %s25, %s336
          %s341 = smul.addr %s340, 64
          %s342 = scalar_lea.hbm %s3, %s341
          %s343 = sshll.u32 %s332, 4
          %s344 = int_to_ptr.vmem [resolvable:$true] %s343
          %349 = dma.vmem_to_hbm [thread:$0]  %s344, 128, %s342, %s329, 64, 64, 4
        $region48: #{tpu_custom_call.1} parent=31 // pred_fallthru
          _
      $region32: #{tpu_custom_call.1} parent=5 // pred_fallthru
        _
      %p350 = scmp.le.s32.totalorder 2, %s16
      // Predicated region
      $region49: #{tpu_custom_call.1} parent=5 // pred_check
        %p351 = pneg %p350
      $region50: #{tpu_custom_call.1} parent=5 // pred_check_branch
        %353 = sbr.rel (%p351) target = $region52
      $region51: #{tpu_custom_call.1} parent=5 // pred_region
        %s354 = ssub.s32 %s16, 2
        // Predicated region
        $region53: #{tpu_custom_call.1} parent=51 // pred_check
          %p355 = pneg %p137
        $region54: #{tpu_custom_call.1} parent=51 // pred_check_branch
          %357 = sbr.rel (%p355) target = $region56
        $region55: #{tpu_custom_call.1} parent=51 // pred_region
          %s358 = sand.u32 %s122, 1
          %s359 = scalar_lea.sflag [#allocation4], %s358
          %s360 = sand.u32 %s122, 1
          %s361 = smul.addr %s360, 8
          %s362 = scalar_lea.vmem [#allocation8], %s361
          %363 = dma.done %s359, 128
        $region56: #{tpu_custom_call.1} parent=51 // pred_fallthru
          _
      $region52: #{tpu_custom_call.1} parent=5 // pred_fallthru
        _
    $region6: #{tpu_custom_call.1} parent=1 // loop_footer
      %s20 = sadd.s32 1, %s16
    $region7: #{tpu_custom_call.1} parent=1 // loop_footer_branch
      %15 = sbr.rel target = $region3
    $region8: #{tpu_custom_call.1} parent=1 // loop_exit
      _
    %364 = vsyncpa [#allocation3], 1
    %s365 = scalar_lea.sflag [#allocation3], 1
    %366 = vsyncpa %s365, 1
    %367 = vsyncpa [#allocation6], 1
    %368 = vsyncpa [#allocation4], 1
    %s369 = scalar_lea.sflag [#allocation4], 1
    %370 = vsyncpa %s369, 1

</llo_original>
